<compile_context>
chip_gen: v7x
topology: tpu7x:2x2x1
jax: 0.10.0
libtpu: 0.0.40
codegen_flags: <defaults>
</compile_context>

<pallas_src>
import jax
import jax.numpy as jnp
from jax.experimental import pallas as pl
from jax.experimental.pallas import tpu as pltpu

NOISE_SIZE = 12
STATE_SPACE = 4  # state_space is external in the original file; fixed here.
HIDDEN1, HIDDEN2, HIDDEN3 = 128, 256, 256

_TB_TARGET = 2048  # target batch-tile rows for large batches


def _round_up(x, m):
    return ((x + m - 1) // m) * m


def _default_epilogue_dtype():
    """bf16 epilogue on bf16-native VPUs (v6e/v7x); f32 on v5 and older."""
    try:
        kind = jax.devices()[0].device_kind.lower()
    except Exception:
        return jnp.float32
    if any(tag in kind for tag in ("v2", "v3", "v4", "v5")):
        return jnp.float32
    return jnp.bfloat16


def _choose_tb(batch):
    """Batch tile: large enough to amortize the ~0.35us/step grid overhead,
    >= 2 grid steps on medium/large batches (v7x dual-TensorCore), prefer
    multiples of 128 (v5e MXU) when cheap, and bound padding waste."""
    if batch <= 256:
        return _round_up(max(batch, 8), 8)
    steps = max(2, pl.cdiv(batch, _TB_TARGET))
    tb = _round_up(pl.cdiv(batch, steps), 8)
    tb128 = _round_up(tb, 128)
    # Prefer a 128-multiple tile if the extra batch padding stays small.
    if steps * tb128 <= batch + max(batch // 10, 128):
        tb = tb128
    return min(tb, _TB_TARGET)


def _generator_kernel(z_ref,
                      w1_ref, b1_ref,
                      w2_ref, b2_ref,
                      w3_ref, b3_ref,
                      w4_ref, b4_ref,
                      out_ref):
    """Fused 4-layer MLP: bf16 MXU operands, f32 accumulate; the bias/ReLU
    epilogue runs in the dtype of the bias refs (bf16 on v6e/v7x, f32 on
    v5e and for the final layer)."""

    def layer(x_bf16, w_ref, b_ref, relu):
        acc = jnp.dot(x_bf16, w_ref[...], preferred_element_type=jnp.float32)
        h = acc.astype(b_ref.dtype) + b_ref[...]
        if relu:
            h = jnp.maximum(h, 0.0).astype(jnp.bfloat16)
        return h

    x = z_ref[...].astype(jnp.bfloat16)           # (TB, 12)
    h = layer(x, w1_ref, b1_ref, relu=True)       # (TB, 128) bf16
    h = layer(h, w2_ref, b2_ref, relu=True)       # (TB, 256) bf16
    h = layer(h, w3_ref, b3_ref, relu=True)       # (TB, 256) bf16
    out = layer(h, w4_ref, b4_ref, relu=False)    # (TB, 4)   f32
    out_ref[...] = out.astype(out_ref.dtype)


def prepare_kernel_params(params, epilogue_dtype=None):
    """One-time conversion of PyTorch-layout params into kernel layout.

    W{i}: (out, in) f32 -> (in, out) bf16 MXU operands.  No lane padding:
    W1 stays (12, 128) and W4 stays (256, 4).
    b1..b3: (out,) -> (1, out) in the epilogue dtype (bf16 on v6e/v7x,
    f32 on v5e).  b4 stays f32 so the final bias-add / output keep f32
    precision (it is only (1, 4); cost is nil).
    """
    if epilogue_dtype is None:
        epilogue_dtype = _default_epilogue_dtype()

    def w(name):
        return jnp.asarray(params[name], jnp.float32).T.astype(jnp.bfloat16)

    def b(name, dtype):
        return jnp.asarray(params[name], jnp.float32).astype(dtype)[None, :]

    return (w("W1"), b("b1", epilogue_dtype),
            w("W2"), b("b2", epilogue_dtype),
            w("W3"), b("b3", epilogue_dtype),
            w("W4"), b("b4", jnp.float32))


def generator_forward(z, kparams):
    """Generator forward in one batch-tiled Pallas kernel.

    z:       (B, NOISE_SIZE) float32
    kparams: output of prepare_kernel_params
    returns  (B, STATE_SPACE) float32
    """
    B = z.shape[0]
    TB = _choose_tb(B)
    B_pad = _round_up(B, TB)

    z_p = z.astype(jnp.float32)
    if B_pad != B:
        z_p = jnp.pad(z_p, ((0, B_pad - B), (0, 0)))  # batch rows only

    w1, b1, w2, b2, w3, b3, w4, b4 = kparams

    grid = (B_pad // TB,)
    act_map = lambda i: (i, 0)      # batch-tiled activations / output
    fixed_map = lambda i: (0, 0)    # weights & biases stay VMEM-resident

    flops = 2 * B_pad * (NOISE_SIZE * HIDDEN1 + HIDDEN1 * HIDDEN2
                         + HIDDEN2 * HIDDEN3 + HIDDEN3 * STATE_SPACE)
    param_bytes = sum(int(a.size) * a.dtype.itemsize
                      for a in (w1, b1, w2, b2, w3, b3, w4, b4))
    bytes_accessed = (param_bytes
                      + B_pad * NOISE_SIZE * 4
                      + B_pad * STATE_SPACE * 4)

    out = pl.pallas_call(
        _generator_kernel,
        out_shape=jax.ShapeDtypeStruct((B_pad, STATE_SPACE), jnp.float32),
        grid=grid,
        in_specs=[
            pl.BlockSpec((TB, NOISE_SIZE), act_map),
            pl.BlockSpec((NOISE_SIZE, HIDDEN1), fixed_map),
            pl.BlockSpec((1, HIDDEN1), fixed_map),
            pl.BlockSpec((HIDDEN1, HIDDEN2), fixed_map),
            pl.BlockSpec((1, HIDDEN2), fixed_map),
            pl.BlockSpec((HIDDEN2, HIDDEN3), fixed_map),
            pl.BlockSpec((1, HIDDEN3), fixed_map),
            pl.BlockSpec((HIDDEN3, STATE_SPACE), fixed_map),
            pl.BlockSpec((1, STATE_SPACE), fixed_map),
        ],
        out_specs=pl.BlockSpec((TB, STATE_SPACE), act_map),
        compiler_params=pltpu.CompilerParams(
            dimension_semantics=("parallel",),
            vmem_limit_bytes=32 * 1024 * 1024),
        cost_estimate=pl.CostEstimate(
            flops=flops, transcendentals=0, bytes_accessed=bytes_accessed),
    )(z_p, w1, b1, w2, b2, w3, b3, w4, b4)

    if B_pad != B:
        out = out[:B]
    return out


def init_params(key):
    """Deterministic init mimicking PyTorch nn.Linear default (U[-1/sqrt(fan_in), +])."""
    dims = [(NOISE_SIZE, HIDDEN1), (HIDDEN1, HIDDEN2),
            (HIDDEN2, HIDDEN3), (HIDDEN3, STATE_SPACE)]
    params = {}
    for i, (fan_in, fan_out) in enumerate(dims, start=1):
        key, kw, kb = jax.random.split(key, 3)
        bound = 1.0 / jnp.sqrt(jnp.float32(fan_in))
        # PyTorch convention: weight shape (out, in)
        params[f"W{i}"] = jax.random.uniform(
            kw, (fan_out, fan_in), jnp.float32, -bound, bound)
        params[f"b{i}"] = jax.random.uniform(
            kb, (fan_out,), jnp.float32, -bound, bound)
    return params


def reference_forward(z, params):
    """Plain-JAX f32 reference matching the PyTorch forward exactly."""
    x = jnp.maximum(z @ params["W1"].T + params["b1"], 0.0)
    x = jnp.maximum(x @ params["W2"].T + params["b2"], 0.0)
    x = jnp.maximum(x @ params["W3"].T + params["b3"], 0.0)
    return x @ params["W4"].T + params["b4"]


if __name__ == "__main__":
    key = jax.random.PRNGKey(0)
    key, kz = jax.random.split(key)

    batch = 8
    z = jax.random.normal(kz, (batch, NOISE_SIZE), jnp.float32)
    params = init_params(key)
    kparams = prepare_kernel_params(params)  # one-time layout conversion

    fwd = jax.jit(generator_forward)
    out = jax.block_until_ready(fwd(z, kparams))

    ref = reference_forward(z, params)
    assert out.shape == (batch, STATE_SPACE)
    # bf16 MXU operands (and bf16 epilogue on v6e/v7x) vs an f32 reference.
    assert jnp.allclose(out, ref, atol=2e-2, rtol=2e-2), "mismatch vs reference"

    print("KERNEL_OK")
</pallas_src>

<mosaic_0001>
module attributes {stable_mosaic.version = 11 : i64} {
  func.func @_generator_kernel(%arg0: i32, %arg1: memref<8x12xf32, #tpu.memory_space<vmem>>, %arg2: memref<12x128xbf16, #tpu.memory_space<vmem>>, %arg3: memref<1x128xbf16, #tpu.memory_space<vmem>>, %arg4: memref<128x256xbf16, #tpu.memory_space<vmem>>, %arg5: memref<1x256xbf16, #tpu.memory_space<vmem>>, %arg6: memref<256x256xbf16, #tpu.memory_space<vmem>>, %arg7: memref<1x256xbf16, #tpu.memory_space<vmem>>, %arg8: memref<256x4xbf16, #tpu.memory_space<vmem>>, %arg9: memref<1x4xf32, #tpu.memory_space<vmem>>, %arg10: memref<8x4xf32, #tpu.memory_space<vmem>>) attributes {dimension_semantics = [#tpu.dimension_semantics<parallel>], iteration_bounds = array<i64: 1>, scalar_prefetch = 0 : i64, scratch_operands = 0 : i64, tpu.core_type = #tpu.core_type<tc>, window_params = [{transform_indices = @transform_0, window_bounds = array<i64: 8, 12>}, {pipeline_mode = #tpu.pipeline_mode<synchronous>, transform_indices = @transform_1, window_bounds = array<i64: 12, 128>}, {pipeline_mode = #tpu.pipeline_mode<synchronous>, transform_indices = @transform_2, window_bounds = array<i64: 1, 128>}, {pipeline_mode = #tpu.pipeline_mode<synchronous>, transform_indices = @transform_3, window_bounds = array<i64: 128, 256>}, {pipeline_mode = #tpu.pipeline_mode<synchronous>, transform_indices = @transform_4, window_bounds = array<i64: 1, 256>}, {pipeline_mode = #tpu.pipeline_mode<synchronous>, transform_indices = @transform_5, window_bounds = array<i64: 256, 256>}, {pipeline_mode = #tpu.pipeline_mode<synchronous>, transform_indices = @transform_6, window_bounds = array<i64: 1, 256>}, {pipeline_mode = #tpu.pipeline_mode<synchronous>, transform_indices = @transform_7, window_bounds = array<i64: 256, 4>}, {pipeline_mode = #tpu.pipeline_mode<synchronous>, transform_indices = @transform_8, window_bounds = array<i64: 1, 4>}, {transform_indices = @transform_9, window_bounds = array<i64: 8, 4>}]} {
    %c0 = arith.constant 0 : index
    %c0_0 = arith.constant 0 : index
    %0 = vector.load %arg1[%c0, %c0_0] : memref<8x12xf32, #tpu.memory_space<vmem>>, vector<8x12xf32>
    %1 = arith.truncf %0 : vector<8x12xf32> to vector<8x12xbf16>
    %c0_1 = arith.constant 0 : index
    %c0_2 = arith.constant 0 : index
    %2 = vector.load %arg2[%c0_1, %c0_2] : memref<12x128xbf16, #tpu.memory_space<vmem>>, vector<12x128xbf16>
    %cst = arith.constant dense<0.000000e+00> : vector<8x128xf32>
    %3 = tpu.matmul %1, %2, %cst {dimension_numbers = #tpu.dot_dimension_numbers<[1], [0], [0], [1], [0, 0, 1, 1], [], []>} : vector<8x12xbf16>, vector<12x128xbf16>, vector<8x128xf32> -> vector<8x128xf32>
    %4 = arith.truncf %3 : vector<8x128xf32> to vector<8x128xbf16>
    %c0_3 = arith.constant 0 : index
    %c0_4 = arith.constant 0 : index
    %5 = vector.load %arg3[%c0_3, %c0_4] : memref<1x128xbf16, #tpu.memory_space<vmem>>, vector<1x128xbf16>
    %6 = vector.broadcast %5 : vector<1x128xbf16> to vector<8x128xbf16>
    %7 = arith.addf %4, %6 : vector<8x128xbf16>
    %cst_5 = arith.constant 0.000000e+00 : bf16
    %8 = vector.broadcast %cst_5 : bf16 to vector<8x128xbf16>
    %9 = arith.maximumf %7, %8 : vector<8x128xbf16>
    %c0_6 = arith.constant 0 : index
    %c0_7 = arith.constant 0 : index
    %10 = vector.load %arg4[%c0_6, %c0_7] : memref<128x256xbf16, #tpu.memory_space<vmem>>, vector<128x256xbf16>
    %cst_8 = arith.constant dense<0.000000e+00> : vector<8x256xf32>
    %11 = tpu.matmul %9, %10, %cst_8 {dimension_numbers = #tpu.dot_dimension_numbers<[1], [0], [0], [1], [0, 0, 1, 1], [], []>} : vector<8x128xbf16>, vector<128x256xbf16>, vector<8x256xf32> -> vector<8x256xf32>
    %12 = arith.truncf %11 : vector<8x256xf32> to vector<8x256xbf16>
    %c0_9 = arith.constant 0 : index
    %c0_10 = arith.constant 0 : index
    %13 = vector.load %arg5[%c0_9, %c0_10] : memref<1x256xbf16, #tpu.memory_space<vmem>>, vector<1x256xbf16>
    %14 = vector.broadcast %13 : vector<1x256xbf16> to vector<8x256xbf16>
    %15 = arith.addf %12, %14 : vector<8x256xbf16>
    %cst_11 = arith.constant 0.000000e+00 : bf16
    %16 = vector.broadcast %cst_11 : bf16 to vector<8x256xbf16>
    %17 = arith.maximumf %15, %16 : vector<8x256xbf16>
    %c0_12 = arith.constant 0 : index
    %c0_13 = arith.constant 0 : index
    %18 = vector.load %arg6[%c0_12, %c0_13] : memref<256x256xbf16, #tpu.memory_space<vmem>>, vector<256x256xbf16>
    %cst_14 = arith.constant dense<0.000000e+00> : vector<8x256xf32>
    %19 = tpu.matmul %17, %18, %cst_14 {dimension_numbers = #tpu.dot_dimension_numbers<[1], [0], [0], [1], [0, 0, 1, 1], [], []>} : vector<8x256xbf16>, vector<256x256xbf16>, vector<8x256xf32> -> vector<8x256xf32>
    %20 = arith.truncf %19 : vector<8x256xf32> to vector<8x256xbf16>
    %c0_15 = arith.constant 0 : index
    %c0_16 = arith.constant 0 : index
    %21 = vector.load %arg7[%c0_15, %c0_16] : memref<1x256xbf16, #tpu.memory_space<vmem>>, vector<1x256xbf16>
    %22 = vector.broadcast %21 : vector<1x256xbf16> to vector<8x256xbf16>
    %23 = arith.addf %20, %22 : vector<8x256xbf16>
    %cst_17 = arith.constant 0.000000e+00 : bf16
    %24 = vector.broadcast %cst_17 : bf16 to vector<8x256xbf16>
    %25 = arith.maximumf %23, %24 : vector<8x256xbf16>
    %c0_18 = arith.constant 0 : index
    %c0_19 = arith.constant 0 : index
    %26 = vector.load %arg8[%c0_18, %c0_19] : memref<256x4xbf16, #tpu.memory_space<vmem>>, vector<256x4xbf16>
    %cst_20 = arith.constant dense<0.000000e+00> : vector<8x4xf32>
    %27 = tpu.matmul %25, %26, %cst_20 {dimension_numbers = #tpu.dot_dimension_numbers<[1], [0], [0], [1], [0, 0, 1, 1], [], []>} : vector<8x256xbf16>, vector<256x4xbf16>, vector<8x4xf32> -> vector<8x4xf32>
    %c0_21 = arith.constant 0 : index
    %c0_22 = arith.constant 0 : index
    %28 = vector.load %arg9[%c0_21, %c0_22] : memref<1x4xf32, #tpu.memory_space<vmem>>, vector<1x4xf32>
    %29 = vector.broadcast %28 : vector<1x4xf32> to vector<8x4xf32>
    %30 = arith.addf %27, %29 : vector<8x4xf32>
    %c0_23 = arith.constant 0 : index
    %c0_24 = arith.constant 0 : index
    %31 = vector.load %arg10[%c0_23, %c0_24] : memref<8x4xf32, #tpu.memory_space<vmem>>, vector<8x4xf32>
    tpu.vector_store %arg10[%c0_23, %c0_24], %30 {strides = array<i32>} : memref<8x4xf32, #tpu.memory_space<vmem>>, vector<8x4xf32>,
    return
  }
  func.func @transform_0(%arg0: i32) -> (i32, i32) {
    %c0_i32 = arith.constant 0 : i32
    %c0_i32_0 = arith.constant 0 : i32
    return %arg0, %c0_i32 : i32, i32
  }
  func.func @transform_1(%arg0: i32) -> (i32, i32) {
    %c0_i32 = arith.constant 0 : i32
    %c0_i32_0 = arith.constant 0 : i32
    %c0_i32_1 = arith.constant 0 : i32
    return %c0_i32, %c0_i32_0 : i32, i32
  }
  func.func @transform_2(%arg0: i32) -> (i32, i32) {
    %c0_i32 = arith.constant 0 : i32
    %c0_i32_0 = arith.constant 0 : i32
    %c0_i32_1 = arith.constant 0 : i32
    return %c0_i32, %c0_i32_0 : i32, i32
  }
  func.func @transform_3(%arg0: i32) -> (i32, i32) {
    %c0_i32 = arith.constant 0 : i32
    %c0_i32_0 = arith.constant 0 : i32
    %c0_i32_1 = arith.constant 0 : i32
    return %c0_i32, %c0_i32_0 : i32, i32
  }
  func.func @transform_4(%arg0: i32) -> (i32, i32) {
    %c0_i32 = arith.constant 0 : i32
    %c0_i32_0 = arith.constant 0 : i32
    %c0_i32_1 = arith.constant 0 : i32
    return %c0_i32, %c0_i32_0 : i32, i32
  }
  func.func @transform_5(%arg0: i32) -> (i32, i32) {
    %c0_i32 = arith.constant 0 : i32
    %c0_i32_0 = arith.constant 0 : i32
    %c0_i32_1 = arith.constant 0 : i32
    return %c0_i32, %c0_i32_0 : i32, i32
  }
  func.func @transform_6(%arg0: i32) -> (i32, i32) {
    %c0_i32 = arith.constant 0 : i32
    %c0_i32_0 = arith.constant 0 : i32
    %c0_i32_1 = arith.constant 0 : i32
    return %c0_i32, %c0_i32_0 : i32, i32
  }
  func.func @transform_7(%arg0: i32) -> (i32, i32) {
    %c0_i32 = arith.constant 0 : i32
    %c0_i32_0 = arith.constant 0 : i32
    %c0_i32_1 = arith.constant 0 : i32
    return %c0_i32, %c0_i32_0 : i32, i32
  }
  func.func @transform_8(%arg0: i32) -> (i32, i32) {
    %c0_i32 = arith.constant 0 : i32
    %c0_i32_0 = arith.constant 0 : i32
    %c0_i32_1 = arith.constant 0 : i32
    return %c0_i32, %c0_i32_0 : i32, i32
  }
  func.func @transform_9(%arg0: i32) -> (i32, i32) {
    %c0_i32 = arith.constant 0 : i32
    %c0_i32_0 = arith.constant 0 : i32
    return %arg0, %c0_i32 : i32, i32
  }
}

</mosaic_0001>

<llo_original>
// kernel: generator_forward.1
$region0: #{generator_forward.1}
  #allocation0 [shape = 'u32[]', space=smem, size = 0x4, offset = 0x4, fixed_abs, tag = 'smem constant byte address 0x4 - core index']
  #allocation1 [shape = 'u32[144,128]{1,0:T(1,128)}', space=vmem, size = 0x12000, scoped, tag = 'internal scratch']
  %s0 = inlined_call_operand.vmem [shape: f32[8,12], index: 0, kind: input, shape index: {}]
  %s1 = inlined_call_operand.hbm [shape: bf16[12,128], index: 1, kind: input, shape index: {}]
  %s2 = inlined_call_operand.vmem [shape: bf16[1,128], index: 2, kind: input, shape index: {}]
  %s3 = inlined_call_operand.vmem [shape: bf16[128,256], index: 3, kind: input, shape index: {}]
  %s4 = inlined_call_operand.vmem [shape: bf16[1,256], index: 4, kind: input, shape index: {}]
  %s5 = inlined_call_operand.hbm [shape: bf16[256,256], index: 5, kind: input, shape index: {}]
  %s6 = inlined_call_operand.vmem [shape: bf16[1,256], index: 6, kind: input, shape index: {}]
  %s7 = inlined_call_operand.vmem [shape: bf16[256,4], index: 7, kind: input, shape index: {}]
  %s8 = inlined_call_operand.vmem [shape: f32[1,4], index: 8, kind: input, shape index: {}]
  %s9 = inlined_call_operand.vmem [shape: f32[8,4], index: 9, kind: output, shape index: {}]
  %s10 = sld [smem:[#allocation0]]
  $region54: #{generator_forward.1} parent=0
    _
  %s12 = ssub.s32 1, %s10
  %s13 = scalar_select 0, %s12, %s10
  $region1: #{generator_forward.1} parent=0
    #allocation2 [shape = 'u8[4096]{0}', space=vmem, size = 0x1000, scoped, tag = 'input window, operand 1, single buffered']
    #allocation3 [shape = 's32[1]{0}', space=sflag, size = 0x4, scoped, tag = 'scoped memory for generator_forward.1']
    #allocation4 [shape = 'u8[131072]{0}', space=vmem, size = 0x20000, scoped, tag = 'input window, operand 5, single buffered']
    #allocation5 [shape = 's32[1]{0}', space=sflag, size = 0x4, scoped, tag = 'scoped memory for generator_forward.1']
    %14 = vsyncpa [#allocation3], 0
    %15 = vsyncpa [#allocation5], 0
    // Predicated region
    $region2: #{generator_forward.1} parent=1 // pred_check
      _
    $region3: #{generator_forward.1} parent=1 // pred_check_branch
      %17 = sbr.rel (0) target = $region5
    $region4: #{generator_forward.1} parent=1 // pred_region
      _
    $region5: #{generator_forward.1} parent=1 // pred_fallthru
      _
    // Predicated region
    $region6: #{generator_forward.1} parent=1 // pred_check
      _
    $region7: #{generator_forward.1} parent=1 // pred_check_branch
      %19 = sbr.rel (0) target = $region9
    $region8: #{generator_forward.1} parent=1 // pred_region
      %s21 = ssub.s32 128, 128
      %22 = vsyncadd [#allocation3], %s21
      %s23 = sshll.u32 [#allocation2], 4
      %s24 = int_to_ptr.vmem [resolvable:$true] %s23
      %29 = dma.hbm_to_vmem [thread:$0]  %s1, 128, %s24, [#allocation3], 64, 64, 4
    $region9: #{generator_forward.1} parent=1 // pred_fallthru
      _
    // Predicated region
    $region10: #{generator_forward.1} parent=1 // pred_check
      _
    $region11: #{generator_forward.1} parent=1 // pred_check_branch
      %31 = sbr.rel (0) target = $region13
    $region12: #{generator_forward.1} parent=1 // pred_region
      _
    $region13: #{generator_forward.1} parent=1 // pred_fallthru
      _
    // Predicated region
    $region14: #{generator_forward.1} parent=1 // pred_check
      _
    $region15: #{generator_forward.1} parent=1 // pred_check_branch
      %33 = sbr.rel (0) target = $region17
    $region16: #{generator_forward.1} parent=1 // pred_region
      _
    $region17: #{generator_forward.1} parent=1 // pred_fallthru
      _
    // Predicated region
    $region18: #{generator_forward.1} parent=1 // pred_check
      _
    $region19: #{generator_forward.1} parent=1 // pred_check_branch
      %35 = sbr.rel (0) target = $region21
    $region20: #{generator_forward.1} parent=1 // pred_region
      _
    $region21: #{generator_forward.1} parent=1 // pred_fallthru
      _
    // Predicated region
    $region22: #{generator_forward.1} parent=1 // pred_check
      _
    $region23: #{generator_forward.1} parent=1 // pred_check_branch
      %37 = sbr.rel (0) target = $region25
    $region24: #{generator_forward.1} parent=1 // pred_region
      %s39 = ssub.s32 4096, 4096
      %40 = vsyncadd [#allocation5], %s39
      %s41 = sshll.u32 [#allocation4], 4
      %s42 = int_to_ptr.vmem [resolvable:$true] %s41
      %47 = dma.hbm_to_vmem [thread:$0]  %s5, 4096, %s42, [#allocation5], 128, 128, 8
    $region25: #{generator_forward.1} parent=1 // pred_fallthru
      _
    // Predicated region
    $region26: #{generator_forward.1} parent=1 // pred_check
      _
    $region27: #{generator_forward.1} parent=1 // pred_check_branch
      %49 = sbr.rel (0) target = $region29
    $region28: #{generator_forward.1} parent=1 // pred_region
      _
    $region29: #{generator_forward.1} parent=1 // pred_fallthru
      _
    // Predicated region
    $region30: #{generator_forward.1} parent=1 // pred_check
      _
    $region31: #{generator_forward.1} parent=1 // pred_check_branch
      %51 = sbr.rel (0) target = $region33
    $region32: #{generator_forward.1} parent=1 // pred_region
      _
    $region33: #{generator_forward.1} parent=1 // pred_fallthru
      _
    // Predicated region
    $region34: #{generator_forward.1} parent=1 // pred_check
      _
    $region35: #{generator_forward.1} parent=1 // pred_check_branch
      %53 = sbr.rel (0) target = $region37
    $region36: #{generator_forward.1} parent=1 // pred_region
      _
    $region37: #{generator_forward.1} parent=1 // pred_fallthru
      _
    // Predicated region
    $region38: #{generator_forward.1} parent=1 // pred_check
      _
    $region39: #{generator_forward.1} parent=1 // pred_check_branch
      %55 = sbr.rel (0) target = $region41
    $region40: #{generator_forward.1} parent=1 // pred_region
      %56 = dma.done [#allocation3], 128
    $region41: #{generator_forward.1} parent=1 // pred_fallthru
      _
    // Predicated region
    $region42: #{generator_forward.1} parent=1 // pred_check
      _
    $region43: #{generator_forward.1} parent=1 // pred_check_branch
      %58 = sbr.rel (0) target = $region45
    $region44: #{generator_forward.1} parent=1 // pred_region
      %59 = dma.done [#allocation5], 4096
    $region45: #{generator_forward.1} parent=1 // pred_fallthru
      _
    %v61 = vld [vmem:[%s0] sm:$0xff]
    %v62 = vpack.c.bf16 %v61, %v61
    %v63 = vld [vmem:[#allocation2] sm:$0xf]
    %v64 = vld [vmem:[#allocation2 + $0x4] sm:$0x3]
    %v67 = vunpack.c.l.b16 %v63
    %v68 = vunpack.c.l.b16 %v64
    %v69 = vpack.c.b16 %v68, %v67
    %vm70 = vcmask 97280
    %v72 = vsel %vm70, %v62, 0
    %vm74 = vcmask 1045504
    %v76 = vsel %vm74, %v69, 0
    %78 = vmatprep.subr.bf16.mxu0 0
    %79 = vmatpush1.bf16.msra.mxu0 %v76
    %80 = vmatprep.subr.bf16.mxu0 0
    %81 = vmatpush1.bf16.msra.mxu0 0
    %82 = vmatprep.subr.bf16.mxu0 0
    %83 = vmatpush1.bf16.msra.mxu0 0
    %84 = vmatprep.subr.bf16.mxu0 0
    %85 = vmatpush1.bf16.msra.mxu0 0
    %86 = vmatprep.subr.bf16.mxu0 0
    %87 = vmatpush1.bf16.msra.mxu0 0
    %88 = vmatprep.subr.bf16.mxu0 0
    %89 = vmatpush1.bf16.msra.mxu0 0
    %90 = vmatprep.subr.bf16.mxu0 0
    %91 = vmatpush1.bf16.msra.mxu0 0
    %92 = vmatprep.subr.bf16.mxu0 0
    %93 = vmatpush1.bf16.msra.mxu0 0
    %94 = vmatprep.subr.bf16.mxu0 0
    %95 = vmatpush1.bf16.msra.mxu0 0
    %96 = vmatprep.subr.bf16.mxu0 0
    %97 = vmatpush1.bf16.msra.mxu0 0
    %98 = vmatprep.subr.bf16.mxu0 0
    %99 = vmatpush1.bf16.msra.mxu0 0
    %100 = vmatprep.subr.bf16.mxu0 0
    %101 = vmatpush1.bf16.msra.mxu0 0
    %102 = vmatprep.subr.bf16.mxu0 0
    %103 = vmatpush1.bf16.msra.mxu0 0
    %104 = vmatprep.subr.bf16.mxu0 0
    %105 = vmatpush1.bf16.msra.mxu0 0
    %106 = vmatprep.subr.bf16.mxu0 0
    %107 = vmatpush1.bf16.msra.mxu0 0
    %108 = vmatprep.subr.bf16.mxu0 0
    %109 = vmatpush1.bf16.msra.mxu0 0
    %110 = vmatprep.mubr.bf16.mxu0 0
    %111 = vmatmul.mubr.bf16.gmra.mrb[0].mxu0 %v72
    %v112 = vpop.f32.mrb[0].mxu0
    %v113 = vadd.f32 0.0, %v112
    %v114 = vpop.f32.mrb[0].mxu0
    %v115 = vpop.f32.mrb[0].mxu0
    %v116 = vpop.f32.mrb[0].mxu0
    %117 = vdwg.mxu0
    %v118 = vpack.c.bf16 %v113, %v113
    %v119 = vld [vmem:[%s2] sm:$0x1]
    %v121 = vpack.i.b16 %v119, %v119
    %v123 = vlaneseq
    %v124 = vshrl.u32 %v123, 7
    %v125 = vsub.s32 0, %v124
    %v126 = vrot.slane %v121, %v125
    %v127 = vadd.bf16 %v118, %v126
    %v128 = vmax.bf16 %v127, 0
    %v129 = vld [vmem:[%s3] sm:$0xff]
    %v130 = vld [vmem:[%s3 + $0x8] sm:$0xff]
    %v131 = vld [vmem:[%s3 + $0x10] sm:$0xff]
    %v132 = vld [vmem:[%s3 + $0x18] sm:$0xff]
    %v133 = vld [vmem:[%s3 + $0x20] sm:$0xff]
    %v134 = vld [vmem:[%s3 + $0x28] sm:$0xff]
    %v135 = vld [vmem:[%s3 + $0x30] sm:$0xff]
    %v136 = vld [vmem:[%s3 + $0x38] sm:$0xff]
    %v137 = vld [vmem:[%s3 + $0x40] sm:$0xff]
    %v138 = vld [vmem:[%s3 + $0x48] sm:$0xff]
    %v139 = vld [vmem:[%s3 + $0x50] sm:$0xff]
    %v140 = vld [vmem:[%s3 + $0x58] sm:$0xff]
    %v141 = vld [vmem:[%s3 + $0x60] sm:$0xff]
    %v142 = vld [vmem:[%s3 + $0x68] sm:$0xff]
    %v143 = vld [vmem:[%s3 + $0x70] sm:$0xff]
    %v144 = vld [vmem:[%s3 + $0x78] sm:$0xff]
    %v161 = vunpack.c.l.b16 %v129
    %v162 = vunpack.c.h.b16 %v129
    %v163 = vunpack.c.l.b16 %v130
    %v164 = vunpack.c.h.b16 %v130
    %v165 = vunpack.c.l.b16 %v131
    %v166 = vunpack.c.h.b16 %v131
    %v167 = vunpack.c.l.b16 %v132
    %v168 = vunpack.c.h.b16 %v132
    %v169 = vunpack.c.l.b16 %v133
    %v170 = vunpack.c.h.b16 %v133
    %v171 = vunpack.c.l.b16 %v134
    %v172 = vunpack.c.h.b16 %v134
    %v173 = vunpack.c.l.b16 %v135
    %v174 = vunpack.c.h.b16 %v135
    %v175 = vunpack.c.l.b16 %v136
    %v176 = vunpack.c.h.b16 %v136
    %v177 = vunpack.c.l.b16 %v137
    %v178 = vunpack.c.h.b16 %v137
    %v179 = vunpack.c.l.b16 %v138
    %v180 = vunpack.c.h.b16 %v138
    %v181 = vunpack.c.l.b16 %v139
    %v182 = vunpack.c.h.b16 %v139
    %v183 = vunpack.c.l.b16 %v140
    %v184 = vunpack.c.h.b16 %v140
    %v185 = vunpack.c.l.b16 %v141
    %v186 = vunpack.c.h.b16 %v141
    %v187 = vunpack.c.l.b16 %v142
    %v188 = vunpack.c.h.b16 %v142
    %v189 = vunpack.c.l.b16 %v143
    %v190 = vunpack.c.h.b16 %v143
    %v191 = vunpack.c.l.b16 %v144
    %v192 = vunpack.c.h.b16 %v144
    %v193 = vpack.c.b16 %v163, %v161
    %v194 = vpack.c.b16 %v164, %v162
    %v195 = vpack.c.b16 %v167, %v165
    %v196 = vpack.c.b16 %v168, %v166
    %v197 = vpack.c.b16 %v171, %v169
    %v198 = vpack.c.b16 %v172, %v170
    %v199 = vpack.c.b16 %v175, %v173
    %v200 = vpack.c.b16 %v176, %v174
    %v201 = vpack.c.b16 %v179, %v177
    %v202 = vpack.c.b16 %v180, %v178
    %v203 = vpack.c.b16 %v183, %v181
    %v204 = vpack.c.b16 %v184, %v182
    %v205 = vpack.c.b16 %v187, %v185
    %v206 = vpack.c.b16 %v188, %v186
    %v207 = vpack.c.b16 %v191, %v189
    %v208 = vpack.c.b16 %v192, %v190
    %225 = vmatprep.subr.bf16.mxu0 %v194
    %226 = vmatpush1.bf16.msra.mxu0 %v193
    %227 = vmatprep.subr.bf16.mxu0 %v196
    %228 = vmatpush1.bf16.msra.mxu0 %v195
    %229 = vmatprep.subr.bf16.mxu0 %v198
    %230 = vmatpush1.bf16.msra.mxu0 %v197
    %231 = vmatprep.subr.bf16.mxu0 %v200
    %232 = vmatpush1.bf16.msra.mxu0 %v199
    %233 = vmatprep.subr.bf16.mxu0 %v202
    %234 = vmatpush1.bf16.msra.mxu0 %v201
    %235 = vmatprep.subr.bf16.mxu0 %v204
    %236 = vmatpush1.bf16.msra.mxu0 %v203
    %237 = vmatprep.subr.bf16.mxu0 %v206
    %238 = vmatpush1.bf16.msra.mxu0 %v205
    %239 = vmatprep.subr.bf16.mxu0 %v208
    %240 = vmatpush1.bf16.msra.mxu0 %v207
    %241 = vmatprep.subr.bf16.mxu0 0
    %242 = vmatpush1.bf16.msra.mxu0 0
    %243 = vmatprep.subr.bf16.mxu0 0
    %244 = vmatpush1.bf16.msra.mxu0 0
    %245 = vmatprep.subr.bf16.mxu0 0
    %246 = vmatpush1.bf16.msra.mxu0 0
    %247 = vmatprep.subr.bf16.mxu0 0
    %248 = vmatpush1.bf16.msra.mxu0 0
    %249 = vmatprep.subr.bf16.mxu0 0
    %250 = vmatpush1.bf16.msra.mxu0 0
    %251 = vmatprep.subr.bf16.mxu0 0
    %252 = vmatpush1.bf16.msra.mxu0 0
    %253 = vmatprep.subr.bf16.mxu0 0
    %254 = vmatpush1.bf16.msra.mxu0 0
    %255 = vmatprep.subr.bf16.mxu0 0
    %256 = vmatpush1.bf16.msra.mxu0 0
    %257 = vmatprep.mubr.bf16.mxu0 0
    %258 = vmatmul.mubr.bf16.gmra.mrb[0].mxu0 %v128
    %v259 = vpop.f32.mrb[0].mxu0
    %v260 = vadd.f32 0.0, %v259
    %v261 = vpop.f32.mrb[0].mxu0
    %v262 = vadd.f32 0.0, %v261
    %v263 = vpop.f32.mrb[0].mxu0
    %v264 = vpop.f32.mrb[0].mxu0
    %265 = vdwg.mxu0
    %v266 = vpack.c.bf16 %v260, %v260
    %v267 = vpack.c.bf16 %v262, %v262
    %v268 = vld [vmem:[%s4] sm:$0x3]
    %v271 = vunpack.c.l.s4 1966171168
    %v272 = vunpack.c.0.s8 %v271
    %v273 = vlaneseq
    %v274 = vshrl.u32 %v273, 7
    %v275 = vsub.s32 %v272, %v274
    %v276 = vrot.slane %v268, %v275
    %v277 = vcombine.high %v276, %v276
    %v279 = vunpack.c.l.s4 1966171168
    %v280 = vunpack.c.0.s8 %v279
    %v281 = vlaneseq
    %v282 = vshrl.u32 %v281, 7
    %v283 = vsub.s32 %v280, %v282
    %v284 = vrot.slane %v276, %v283
    %v286 = vunpack.c.l.s4 1966171168
    %v287 = vunpack.c.0.s8 %v286
    %v288 = vlaneseq
    %v289 = vshrl.u32 %v288, 7
    %v290 = vsub.s32 %v287, %v289
    %v291 = vrot.slane %v277, %v290
    %v293 = vpack.i.b16 %v284, %v284
    %v295 = vlaneseq
    %v296 = vshrl.u32 %v295, 7
    %v297 = vsub.s32 0, %v296
    %v298 = vrot.slane %v293, %v297
    %v300 = vpack.i.b16 %v291, %v291
    %v302 = vlaneseq
    %v303 = vshrl.u32 %v302, 7
    %v304 = vsub.s32 0, %v303
    %v305 = vrot.slane %v300, %v304
    %v306 = vadd.bf16 %v266, %v298
    %v307 = vadd.bf16 %v267, %v305
    %v308 = vmax.bf16 %v306, 0
    %v309 = vmax.bf16 %v307, 0
    %v310 = vld [vmem:[#allocation4] sm:$0xff]
    %v311 = vld [vmem:[#allocation4 + $0x8] sm:$0xff]
    %v312 = vld [vmem:[#allocation4 + $0x10] sm:$0xff]
    %v313 = vld [vmem:[#allocation4 + $0x18] sm:$0xff]
    %v314 = vld [vmem:[#allocation4 + $0x20] sm:$0xff]
    %v315 = vld [vmem:[#allocation4 + $0x28] sm:$0xff]
    %v316 = vld [vmem:[#allocation4 + $0x30] sm:$0xff]
    %v317 = vld [vmem:[#allocation4 + $0x38] sm:$0xff]
    %v318 = vld [vmem:[#allocation4 + $0x40] sm:$0xff]
    %v319 = vld [vmem:[#allocation4 + $0x48] sm:$0xff]
    %v320 = vld [vmem:[#allocation4 + $0x50] sm:$0xff]
    %v321 = vld [vmem:[#allocation4 + $0x58] sm:$0xff]
    %v322 = vld [vmem:[#allocation4 + $0x60] sm:$0xff]
    %v323 = vld [vmem:[#allocation4 + $0x68] sm:$0xff]
    %v324 = vld [vmem:[#allocation4 + $0x70] sm:$0xff]
    %v325 = vld [vmem:[#allocation4 + $0x78] sm:$0xff]
    %v326 = vld [vmem:[#allocation4 + $0x80] sm:$0xff]
    %v327 = vld [vmem:[#allocation4 + $0x88] sm:$0xff]
    %v328 = vld [vmem:[#allocation4 + $0x90] sm:$0xff]
    %v329 = vld [vmem:[#allocation4 + $0x98] sm:$0xff]
    %v330 = vld [vmem:[#allocation4 + $0xa0] sm:$0xff]
    %v331 = vld [vmem:[#allocation4 + $0xa8] sm:$0xff]
    %v332 = vld [vmem:[#allocation4 + $0xb0] sm:$0xff]
    %v333 = vld [vmem:[#allocation4 + $0xb8] sm:$0xff]
    %v334 = vld [vmem:[#allocation4 + $0xc0] sm:$0xff]
    %v335 = vld [vmem:[#allocation4 + $0xc8] sm:$0xff]
    %v336 = vld [vmem:[#allocation4 + $0xd0] sm:$0xff]
    %v337 = vld [vmem:[#allocation4 + $0xd8] sm:$0xff]
    %v338 = vld [vmem:[#allocation4 + $0xe0] sm:$0xff]
    %v339 = vld [vmem:[#allocation4 + $0xe8] sm:$0xff]
    %v340 = vld [vmem:[#allocation4 + $0xf0] sm:$0xff]
    %v341 = vld [vmem:[#allocation4 + $0xf8] sm:$0xff]
    %v374 = vunpack.c.l.b16 %v310
    %v375 = vunpack.c.h.b16 %v310
    %v376 = vunpack.c.l.b16 %v311
    %v377 = vunpack.c.h.b16 %v311
    %v378 = vunpack.c.l.b16 %v312
    %v379 = vunpack.c.h.b16 %v312
    %v380 = vunpack.c.l.b16 %v313
    %v381 = vunpack.c.h.b16 %v313
    %v382 = vunpack.c.l.b16 %v314
    %v383 = vunpack.c.h.b16 %v314
    %v384 = vunpack.c.l.b16 %v315
    %v385 = vunpack.c.h.b16 %v315
    %v386 = vunpack.c.l.b16 %v316
    %v387 = vunpack.c.h.b16 %v316
    %v388 = vunpack.c.l.b16 %v317
    %v389 = vunpack.c.h.b16 %v317
    %v390 = vunpack.c.l.b16 %v318
    %v391 = vunpack.c.h.b16 %v318
    %v392 = vunpack.c.l.b16 %v319
    %v393 = vunpack.c.h.b16 %v319
    %v394 = vunpack.c.l.b16 %v320
    %v395 = vunpack.c.h.b16 %v320
    %v396 = vunpack.c.l.b16 %v321
    %v397 = vunpack.c.h.b16 %v321
    %v398 = vunpack.c.l.b16 %v322
    %v399 = vunpack.c.h.b16 %v322
    %v400 = vunpack.c.l.b16 %v323
    %v401 = vunpack.c.h.b16 %v323
    %v402 = vunpack.c.l.b16 %v324
    %v403 = vunpack.c.h.b16 %v324
    %v404 = vunpack.c.l.b16 %v325
    %v405 = vunpack.c.h.b16 %v325
    %v406 = vunpack.c.l.b16 %v326
    %v407 = vunpack.c.h.b16 %v326
    %v408 = vunpack.c.l.b16 %v327
    %v409 = vunpack.c.h.b16 %v327
    %v410 = vunpack.c.l.b16 %v328
    %v411 = vunpack.c.h.b16 %v328
    %v412 = vunpack.c.l.b16 %v329
    %v413 = vunpack.c.h.b16 %v329
    %v414 = vunpack.c.l.b16 %v330
    %v415 = vunpack.c.h.b16 %v330
    %v416 = vunpack.c.l.b16 %v331
    %v417 = vunpack.c.h.b16 %v331
    %v418 = vunpack.c.l.b16 %v332
    %v419 = vunpack.c.h.b16 %v332
    %v420 = vunpack.c.l.b16 %v333
    %v421 = vunpack.c.h.b16 %v333
    %v422 = vunpack.c.l.b16 %v334
    %v423 = vunpack.c.h.b16 %v334
    %v424 = vunpack.c.l.b16 %v335
    %v425 = vunpack.c.h.b16 %v335
    %v426 = vunpack.c.l.b16 %v336
    %v427 = vunpack.c.h.b16 %v336
    %v428 = vunpack.c.l.b16 %v337
    %v429 = vunpack.c.h.b16 %v337
    %v430 = vunpack.c.l.b16 %v338
    %v431 = vunpack.c.h.b16 %v338
    %v432 = vunpack.c.l.b16 %v339
    %v433 = vunpack.c.h.b16 %v339
    %v434 = vunpack.c.l.b16 %v340
    %v435 = vunpack.c.h.b16 %v340
    %v436 = vunpack.c.l.b16 %v341
    %v437 = vunpack.c.h.b16 %v341
    %v438 = vpack.c.b16 %v376, %v374
    %v439 = vpack.c.b16 %v377, %v375
    %v440 = vpack.c.b16 %v380, %v378
    %v441 = vpack.c.b16 %v381, %v379
    %v442 = vpack.c.b16 %v384, %v382
    %v443 = vpack.c.b16 %v385, %v383
    %v444 = vpack.c.b16 %v388, %v386
    %v445 = vpack.c.b16 %v389, %v387
    %v446 = vpack.c.b16 %v392, %v390
    %v447 = vpack.c.b16 %v393, %v391
    %v448 = vpack.c.b16 %v396, %v394
    %v449 = vpack.c.b16 %v397, %v395
    %v450 = vpack.c.b16 %v400, %v398
    %v451 = vpack.c.b16 %v401, %v399
    %v452 = vpack.c.b16 %v404, %v402
    %v453 = vpack.c.b16 %v405, %v403
    %v454 = vpack.c.b16 %v408, %v406
    %v455 = vpack.c.b16 %v409, %v407
    %v456 = vpack.c.b16 %v412, %v410
    %v457 = vpack.c.b16 %v413, %v411
    %v458 = vpack.c.b16 %v416, %v414
    %v459 = vpack.c.b16 %v417, %v415
    %v460 = vpack.c.b16 %v420, %v418
    %v461 = vpack.c.b16 %v421, %v419
    %v462 = vpack.c.b16 %v424, %v422
    %v463 = vpack.c.b16 %v425, %v423
    %v464 = vpack.c.b16 %v428, %v426
    %v465 = vpack.c.b16 %v429, %v427
    %v466 = vpack.c.b16 %v432, %v430
    %v467 = vpack.c.b16 %v433, %v431
    %v468 = vpack.c.b16 %v436, %v434
    %v469 = vpack.c.b16 %v437, %v435
    %502 = vmatprep.subr.bf16.mxu0 %v439
    %503 = vmatpush1.bf16.msra.mxu0 %v438
    %504 = vmatprep.subr.bf16.mxu0 %v441
    %505 = vmatpush1.bf16.msra.mxu0 %v440
    %506 = vmatprep.subr.bf16.mxu0 %v443
    %507 = vmatpush1.bf16.msra.mxu0 %v442
    %508 = vmatprep.subr.bf16.mxu0 %v445
    %509 = vmatpush1.bf16.msra.mxu0 %v444
    %510 = vmatprep.subr.bf16.mxu0 %v447
    %511 = vmatpush1.bf16.msra.mxu0 %v446
    %512 = vmatprep.subr.bf16.mxu0 %v449
    %513 = vmatpush1.bf16.msra.mxu0 %v448
    %514 = vmatprep.subr.bf16.mxu0 %v451
    %515 = vmatpush1.bf16.msra.mxu0 %v450
    %516 = vmatprep.subr.bf16.mxu0 %v453
    %517 = vmatpush1.bf16.msra.mxu0 %v452
    %518 = vmatprep.subr.bf16.mxu0 %v455
    %519 = vmatpush1.bf16.msra.mxu0 %v454
    %520 = vmatprep.subr.bf16.mxu0 %v457
    %521 = vmatpush1.bf16.msra.mxu0 %v456
    %522 = vmatprep.subr.bf16.mxu0 %v459
    %523 = vmatpush1.bf16.msra.mxu0 %v458
    %524 = vmatprep.subr.bf16.mxu0 %v461
    %525 = vmatpush1.bf16.msra.mxu0 %v460
    %526 = vmatprep.subr.bf16.mxu0 %v463
    %527 = vmatpush1.bf16.msra.mxu0 %v462
    %528 = vmatprep.subr.bf16.mxu0 %v465
    %529 = vmatpush1.bf16.msra.mxu0 %v464
    %530 = vmatprep.subr.bf16.mxu0 %v467
    %531 = vmatpush1.bf16.msra.mxu0 %v466
    %532 = vmatprep.subr.bf16.mxu0 %v469
    %533 = vmatpush1.bf16.msra.mxu0 %v468
    %534 = vmatprep.mubr.bf16.mxu0 %v309
    %535 = vmatmul.mubr.bf16.gmra.mrb[0].mxu0 %v308
    %v536 = vpop.f32.mrb[0].mxu0
    %v537 = vadd.f32 0.0, %v536
    %v538 = vpop.f32.mrb[0].mxu0
    %v539 = vadd.f32 0.0, %v538
    %v540 = vpop.f32.mrb[0].mxu0
    %v541 = vpop.f32.mrb[0].mxu0
    %542 = vdwg.mxu0
    %v543 = vpack.c.bf16 %v537, %v537
    %v544 = vpack.c.bf16 %v539, %v539
    %v545 = vld [vmem:[%s6] sm:$0x3]
    %v548 = vunpack.c.l.s4 1966171168
    %v549 = vunpack.c.0.s8 %v548
    %v550 = vlaneseq
    %v551 = vshrl.u32 %v550, 7
    %v552 = vsub.s32 %v549, %v551
    %v553 = vrot.slane %v545, %v552
    %v554 = vcombine.high %v553, %v553
    %v556 = vunpack.c.l.s4 1966171168
    %v557 = vunpack.c.0.s8 %v556
    %v558 = vlaneseq
    %v559 = vshrl.u32 %v558, 7
    %v560 = vsub.s32 %v557, %v559
    %v561 = vrot.slane %v553, %v560
    %v563 = vunpack.c.l.s4 1966171168
    %v564 = vunpack.c.0.s8 %v563
    %v565 = vlaneseq
    %v566 = vshrl.u32 %v565, 7
    %v567 = vsub.s32 %v564, %v566
    %v568 = vrot.slane %v554, %v567
    %v570 = vpack.i.b16 %v561, %v561
    %v572 = vlaneseq
    %v573 = vshrl.u32 %v572, 7
    %v574 = vsub.s32 0, %v573
    %v575 = vrot.slane %v570, %v574
    %v577 = vpack.i.b16 %v568, %v568
    %v579 = vlaneseq
    %v580 = vshrl.u32 %v579, 7
    %v581 = vsub.s32 0, %v580
    %v582 = vrot.slane %v577, %v581
    %v583 = vadd.bf16 %v543, %v575
    %v584 = vadd.bf16 %v544, %v582
    %v585 = vmax.bf16 %v583, 0
    %v586 = vmax.bf16 %v584, 0
    %v587 = vld [vmem:[%s7] sm:$0xf]
    %v588 = vld [vmem:[%s7 + $0x4] sm:$0xf]
    %v589 = vld [vmem:[%s7 + $0x8] sm:$0xf]
    %v590 = vld [vmem:[%s7 + $0xc] sm:$0xf]
    %v591 = vld [vmem:[%s7 + $0x10] sm:$0xf]
    %v592 = vld [vmem:[%s7 + $0x14] sm:$0xf]
    %v593 = vld [vmem:[%s7 + $0x18] sm:$0xf]
    %v594 = vld [vmem:[%s7 + $0x1c] sm:$0xf]
    %v595 = vld [vmem:[%s7 + $0x20] sm:$0xf]
    %v596 = vld [vmem:[%s7 + $0x24] sm:$0xf]
    %v597 = vld [vmem:[%s7 + $0x28] sm:$0xf]
    %v598 = vld [vmem:[%s7 + $0x2c] sm:$0xf]
    %v599 = vld [vmem:[%s7 + $0x30] sm:$0xf]
    %v600 = vld [vmem:[%s7 + $0x34] sm:$0xf]
    %v601 = vld [vmem:[%s7 + $0x38] sm:$0xf]
    %v602 = vld [vmem:[%s7 + $0x3c] sm:$0xf]
    %v603 = vld [vmem:[%s7 + $0x40] sm:$0xf]
    %v604 = vld [vmem:[%s7 + $0x44] sm:$0xf]
    %v605 = vld [vmem:[%s7 + $0x48] sm:$0xf]
    %v606 = vld [vmem:[%s7 + $0x4c] sm:$0xf]
    %v607 = vld [vmem:[%s7 + $0x50] sm:$0xf]
    %v608 = vld [vmem:[%s7 + $0x54] sm:$0xf]
    %v609 = vld [vmem:[%s7 + $0x58] sm:$0xf]
    %v610 = vld [vmem:[%s7 + $0x5c] sm:$0xf]
    %v611 = vld [vmem:[%s7 + $0x60] sm:$0xf]
    %v612 = vld [vmem:[%s7 + $0x64] sm:$0xf]
    %v613 = vld [vmem:[%s7 + $0x68] sm:$0xf]
    %v614 = vld [vmem:[%s7 + $0x6c] sm:$0xf]
    %v615 = vld [vmem:[%s7 + $0x70] sm:$0xf]
    %v616 = vld [vmem:[%s7 + $0x74] sm:$0xf]
    %v617 = vld [vmem:[%s7 + $0x78] sm:$0xf]
    %v618 = vld [vmem:[%s7 + $0x7c] sm:$0xf]
    %v619 = vld [vmem:[%s8] sm:$0x1]
    %v621 = vlaneseq
    %v622 = vshrl.u32 %v621, 7
    %v623 = vsub.s32 0, %v622
    %v624 = vrot.slane %v619, %v623
    %v658 = vunpack.c.l.b16 %v587
    %v659 = vunpack.c.l.b16 %v588
    %v660 = vunpack.c.l.b16 %v589
    %v661 = vunpack.c.l.b16 %v590
    %v662 = vunpack.c.l.b16 %v591
    %v663 = vunpack.c.l.b16 %v592
    %v664 = vunpack.c.l.b16 %v593
    %v665 = vunpack.c.l.b16 %v594
    %v666 = vunpack.c.l.b16 %v595
    %v667 = vunpack.c.l.b16 %v596
    %v668 = vunpack.c.l.b16 %v597
    %v669 = vunpack.c.l.b16 %v598
    %v670 = vunpack.c.l.b16 %v599
    %v671 = vunpack.c.l.b16 %v600
    %v672 = vunpack.c.l.b16 %v601
    %v673 = vunpack.c.l.b16 %v602
    %v674 = vunpack.c.l.b16 %v603
    %v675 = vunpack.c.l.b16 %v604
    %v676 = vunpack.c.l.b16 %v605
    %v677 = vunpack.c.l.b16 %v606
    %v678 = vunpack.c.l.b16 %v607
    %v679 = vunpack.c.l.b16 %v608
    %v680 = vunpack.c.l.b16 %v609
    %v681 = vunpack.c.l.b16 %v610
    %v682 = vunpack.c.l.b16 %v611
    %v683 = vunpack.c.l.b16 %v612
    %v684 = vunpack.c.l.b16 %v613
    %v685 = vunpack.c.l.b16 %v614
    %v686 = vunpack.c.l.b16 %v615
    %v687 = vunpack.c.l.b16 %v616
    %v688 = vunpack.c.l.b16 %v617
    %v689 = vunpack.c.l.b16 %v618
    %v690 = vpack.c.b16 %v659, %v658
    %v691 = vpack.c.b16 %v661, %v660
    %v692 = vpack.c.b16 %v663, %v662
    %v693 = vpack.c.b16 %v665, %v664
    %v694 = vpack.c.b16 %v667, %v666
    %v695 = vpack.c.b16 %v669, %v668
    %v696 = vpack.c.b16 %v671, %v670
    %v697 = vpack.c.b16 %v673, %v672
    %v698 = vpack.c.b16 %v675, %v674
    %v699 = vpack.c.b16 %v677, %v676
    %v700 = vpack.c.b16 %v679, %v678
    %v701 = vpack.c.b16 %v681, %v680
    %v702 = vpack.c.b16 %v683, %v682
    %v703 = vpack.c.b16 %v685, %v684
    %v704 = vpack.c.b16 %v687, %v686
    %v705 = vpack.c.b16 %v689, %v688
    %722 = vmatprep.subr.bf16.mxu0 0
    %723 = vmatpush1.bf16.msra.mxu0 %v690
    %724 = vmatprep.subr.bf16.mxu0 0
    %725 = vmatpush1.bf16.msra.mxu0 %v691
    %726 = vmatprep.subr.bf16.mxu0 0
    %727 = vmatpush1.bf16.msra.mxu0 %v692
    %728 = vmatprep.subr.bf16.mxu0 0
    %729 = vmatpush1.bf16.msra.mxu0 %v693
    %730 = vmatprep.subr.bf16.mxu0 0
    %731 = vmatpush1.bf16.msra.mxu0 %v694
    %732 = vmatprep.subr.bf16.mxu0 0
    %733 = vmatpush1.bf16.msra.mxu0 %v695
    %734 = vmatprep.subr.bf16.mxu0 0
    %735 = vmatpush1.bf16.msra.mxu0 %v696
    %736 = vmatprep.subr.bf16.mxu0 0
    %737 = vmatpush1.bf16.msra.mxu0 %v697
    %738 = vmatprep.subr.bf16.mxu0 0
    %739 = vmatpush1.bf16.msra.mxu0 %v698
    %740 = vmatprep.subr.bf16.mxu0 0
    %741 = vmatpush1.bf16.msra.mxu0 %v699
    %742 = vmatprep.subr.bf16.mxu0 0
    %743 = vmatpush1.bf16.msra.mxu0 %v700
    %744 = vmatprep.subr.bf16.mxu0 0
    %745 = vmatpush1.bf16.msra.mxu0 %v701
    %746 = vmatprep.subr.bf16.mxu0 0
    %747 = vmatpush1.bf16.msra.mxu0 %v702
    %748 = vmatprep.subr.bf16.mxu0 0
    %749 = vmatpush1.bf16.msra.mxu0 %v703
    %750 = vmatprep.subr.bf16.mxu0 0
    %751 = vmatpush1.bf16.msra.mxu0 %v704
    %752 = vmatprep.subr.bf16.mxu0 0
    %753 = vmatpush1.bf16.msra.mxu0 %v705
    %754 = vmatprep.mubr.bf16.mxu0 %v586
    %755 = vmatmul.mubr.bf16.gmra.mrb[0].mxu0 %v585
    %v756 = vpop.f32.mrb[0].mxu0
    %v757 = vadd.f32 %v624, %v756
    %v758 = vpop.f32.mrb[0].mxu0
    %v759 = vpop.f32.mrb[0].mxu0
    %v760 = vpop.f32.mrb[0].mxu0
    %761 = vdwg.mxu0
    %vm762 = vcmask 31744
    %763 = vst.msk [vmem:[%s9] sm:$0xff] %vm762, %v757
    // Predicated region
    $region46: #{generator_forward.1} parent=1 // pred_check
      _
    $region47: #{generator_forward.1} parent=1 // pred_check_branch
      %765 = sbr.rel (0) target = $region49
    $region48: #{generator_forward.1} parent=1 // pred_region
      _
    $region49: #{generator_forward.1} parent=1 // pred_fallthru
      _
    // Predicated region
    $region50: #{generator_forward.1} parent=1 // pred_check
      _
    $region51: #{generator_forward.1} parent=1 // pred_check_branch
      %767 = sbr.rel (0) target = $region53
    $region52: #{generator_forward.1} parent=1 // pred_region
      _
    $region53: #{generator_forward.1} parent=1 // pred_fallthru
      _
    %768 = vsyncpa [#allocation3], 1
    %769 = vsyncpa [#allocation5], 1

</llo_original>
